<compile_context>
chip_gen: v5e
topology: v5e:2x2
jax: 0.10.0
libtpu: 0.0.40
codegen_flags: <defaults>
</compile_context>

<pallas_src>
import functools

import numpy as np

import jax
import jax.numpy as jnp
from jax.experimental import pallas as pl
from jax.experimental.pallas import tpu as pltpu


def fire_kernel(x_ref, w_sq_ref, b_sq_ref, w_comb_ref, b_comb_ref, mask_ref,
                out_ref, x_lane_ref, im2col_ref, *, W, HW, B, S):
    # x_ref      : (B, Cin, HW)       B images per grid step, spatial on lanes
    # w_sq_ref   : (S, Cin)           squeeze 1x1 weights (already matmul dtype)
    # b_sq_ref   : (S, 1)             f32
    # w_comb_ref : (E1+E3, 9*S)       fused expand1x1 (center tap) + expand3x3
    # b_comb_ref : (E1+E3, 1)         f32
    # mask_ref   : (9, B*HW)          {0,1} boundary masks per 3x3 tap (B-tiled)
    # out_ref    : (B, E1+E3, HW)     already-concatenated [e1 ; e3] channels
    # x_lane_ref : (Cin, B*HW)        VMEM scratch, matmul dtype
    # im2col_ref : (9*S, B*HW)        VMEM scratch, matmul dtype
    BHW = B * HW

    # ---- 1. lane-concat the B images: (B, Cin, HW) -> (Cin, B*HW) scratch ----
    # Pure 128-aligned copies with no cross-iteration live values, so a static
    # unroll is safe (the heavy per-image compute below is NOT per-image).
    for b in range(B):
        x_lane_ref[:, b * HW:(b + 1) * HW] = x_ref[b].astype(x_lane_ref.dtype)

    # ---- 2. squeeze 1x1 conv + ReLU: ONE dot for all B images ----
    sq = jnp.dot(w_sq_ref[...], x_lane_ref[...],
                 preferred_element_type=jnp.float32)
    sq = jnp.maximum(sq + b_sq_ref[...], 0.0)            # (S, B*HW), f32

    # ---- 3. im2col: 9 taps via XLU lane rolls + boundary masks, written
    #          straight into a typed VMEM scratch (no concat temporaries).
    #          Rolls act on the concatenated lane axis; any position that would
    #          pull data from a neighboring image is exactly an out-of-bounds
    #          position the mask already zeroes. ----
    for tap in range(9):
        oy, ox = tap // 3 - 1, tap % 3 - 1
        rows = slice(tap * S, (tap + 1) * S)
        if oy == 0 and ox == 0:
            im2col_ref[rows, :] = sq.astype(im2col_ref.dtype)
        else:
            shift = (-(oy * W + ox)) % BHW
            shifted = pltpu.roll(sq, shift=shift, axis=1)
            keep = mask_ref[tap:tap + 1, :] != 0.0
            im2col_ref[rows, :] = jnp.where(keep, shifted, 0.0).astype(
                im2col_ref.dtype)

    # ---- 4. fused expand1x1 + expand3x3 + bias + ReLU: ONE dot per step ----
    out = jnp.dot(w_comb_ref[...], im2col_ref[...],
                  preferred_element_type=jnp.float32)
    out = jnp.maximum(out + b_comb_ref[...], 0.0).astype(out_ref.dtype)

    # ---- 5. lane-dense per-image stores back to the NCHW-layout output ----
    for b in range(B):
        out_ref[b] = out[:, b * HW:(b + 1) * HW]


def _tap_masks(H, W, HWp):
    """(9, HWp) float {0,1} masks: tap (dy,dx) valid iff the read pixel is in-bounds."""
    HW = H * W
    hw = np.arange(HWp)
    clamped = np.minimum(hw, HW - 1)
    hh = clamped // W
    ww = clamped % W
    valid = (hw < HW).astype(np.float32)
    rows = []
    for dy in range(3):
        for dx in range(3):
            oy, ox = dy - 1, dx - 1
            m = valid.copy()
            if oy == -1:
                m = m * (hh > 0).astype(np.float32)
            if oy == 1:
                m = m * (hh < H - 1).astype(np.float32)
            if ox == -1:
                m = m * (ww > 0).astype(np.float32)
            if ox == 1:
                m = m * (ww < W - 1).astype(np.float32)
            rows.append(m.astype(np.float32))
    return np.stack(rows).astype(np.float32)


def _choose_images_per_step(N):
    """Largest divisor of N that is <= 16 while keeping grid = N // B >= 2
    (so the "parallel" grid axis can shard across v7x's two TensorCores)."""
    best = 1
    for b in range(1, min(N, 16) + 1):
        if N % b == 0 and N // b >= 2:
            best = b
    return best


def fire_pallas(x_nchw, params, *, images_per_step=None,
                matmul_dtype=jnp.float32, out_dtype=jnp.float32):
    """Fire forward. x_nchw: (N, Cin, H, W) -> (N, E1+E3, H, W).

    matmul_dtype=jnp.bfloat16 enables the bf16 MXU path (v6e/v7x) and
    out_dtype=jnp.bfloat16 cuts HBM writeback ~2x; both loosen numerical
    tolerance so they are gated off by default for validation runs.
    """
    w_sq, b_sq, w_e1, b_e1, w_e3, b_e3 = params
    N, Cin, H, W = x_nchw.shape
    S = w_sq.shape[0]
    E1 = w_e1.shape[0]
    E3 = w_e3.shape[0]
    E = E1 + E3
    HW = H * W
    # Pad the flattened spatial axis to a multiple of 128 so every vector store
    # is lane-dense (no-op for 16x16; matters for 13x13 / 27x27 Fire layers).
    HWp = ((HW + 127) // 128) * 128

    B = images_per_step if images_per_step is not None else _choose_images_per_step(N)
    assert N % B == 0, "images_per_step must divide the batch size"

    # NCHW is consumed directly as (N, Cin, H*W): free reshape, no transpose.
    x = x_nchw.reshape(N, Cin, HW).astype(jnp.float32)
    if HWp != HW:
        x = jnp.pad(x, ((0, 0), (0, 0), (0, HWp - HW)))

    # One-time weight re-layouts (tiny; in a real model fold into param init).
    w_sq_k = w_sq[:, :, 0, 0].astype(matmul_dtype)             # (S, Cin)
    b_sq_k = b_sq.reshape(S, 1).astype(jnp.float32)
    # Combined expand weight (E1+E3, 9*S):
    #   rows [0:E1]  = expand1x1 weights placed on the center tap (tap 4),
    #   rows [E1: ]  = expand3x3 weights flattened over (tap, c_in).
    # TODO(synk): for production sizes (E1=E3>=128, S>=32) split into two dots
    # to avoid the ~1.8x zero-MAC overhead of the padded fused weight.
    w_e3_flat = jnp.transpose(w_e3, (0, 2, 3, 1)).reshape(E3, 9 * S)
    w_e1_rows = jnp.zeros((E1, 9 * S), jnp.float32)
    w_e1_rows = w_e1_rows.at[:, 4 * S:5 * S].set(w_e1[:, :, 0, 0])
    w_comb = jnp.concatenate([w_e1_rows, w_e3_flat], axis=0).astype(matmul_dtype)
    b_comb = jnp.concatenate([b_e1, b_e3]).reshape(E, 1).astype(jnp.float32)

    # Boundary masks, tiled across the B lane-concatenated images.
    masks = jnp.asarray(np.tile(_tap_masks(H, W, HWp), (1, B)))   # (9, B*HWp)

    # Explicit VMEM budget for this step size (double-buffered blocks + scratch
    # + big live values), capped well under v7x's 64 MiB physical VMEM.
    f32b = 4
    mm_b = jnp.dtype(matmul_dtype).itemsize
    out_b = jnp.dtype(out_dtype).itemsize
    step_bytes = (2 * B * Cin * HWp * f32b            # input block, 2 buffers
                  + 2 * B * E * HWp * out_b           # output block, 2 buffers
                  + B * HWp * (Cin + 9 * S) * mm_b    # x_lane + im2col scratch
                  + B * HWp * (S + E) * f32b          # sq / out live values
                  + 9 * B * HWp * f32b)               # tap masks
    vmem_limit_bytes = int(min(48 << 20, max(2 * step_bytes, 8 << 20)))

    kernel = functools.partial(fire_kernel, W=W, HW=HWp, B=B, S=S)

    out = pl.pallas_call(
        kernel,
        out_shape=jax.ShapeDtypeStruct((N, E, HWp), out_dtype),
        grid_spec=pltpu.PrefetchScalarGridSpec(
            num_scalar_prefetch=0,
            grid=(N // B,),
            in_specs=[
                pl.BlockSpec((B, Cin, HWp), lambda n: (n, 0, 0)),
                pl.BlockSpec((S, Cin), lambda n: (0, 0)),
                pl.BlockSpec((S, 1), lambda n: (0, 0)),
                pl.BlockSpec((E, 9 * S), lambda n: (0, 0)),
                pl.BlockSpec((E, 1), lambda n: (0, 0)),
                pl.BlockSpec((9, B * HWp), lambda n: (0, 0)),
            ],
            out_specs=pl.BlockSpec((B, E, HWp), lambda n: (n, 0, 0)),
            scratch_shapes=[
                pltpu.VMEM((Cin, B * HWp), matmul_dtype),      # lane-concat x
                pltpu.VMEM((9 * S, B * HWp), matmul_dtype),    # im2col
            ],
        ),
        compiler_params=pltpu.CompilerParams(
            dimension_semantics=("parallel",),
            vmem_limit_bytes=vmem_limit_bytes),
    )(x, w_sq_k, b_sq_k, w_comb, b_comb, masks)

    if HWp != HW:
        out = out[:, :, :HW]
    # (N, E1+E3, H*W) -> NCHW with a free reshape (no transpose).
    return out.reshape(N, E, H, W)


def fire_reference(x_nchw, params):
    """Plain-JAX reference matching nn.Conv2d NCHW semantics."""
    w_sq, b_sq, w_e1, b_e1, w_e3, b_e3 = params

    def conv(x, w, b, pad):
        y = jax.lax.conv_general_dilated(
            x, w, window_strides=(1, 1),
            padding=[(pad, pad), (pad, pad)],
            dimension_numbers=("NCHW", "OIHW", "NCHW"))
        return y + b[None, :, None, None]

    sq = jax.nn.relu(conv(x_nchw, w_sq, b_sq, 0))
    e1 = jax.nn.relu(conv(sq, w_e1, b_e1, 0))
    e3 = jax.nn.relu(conv(sq, w_e3, b_e3, 1))
    return jnp.concatenate([e1, e3], axis=1)


def make_params(key, inplanes, squeeze_planes, e1_planes, e3_planes):
    """Deterministic synthetic parameters in PyTorch Conv2d layout."""
    ks = jax.random.split(key, 6)
    w_sq = 0.1 * jax.random.normal(ks[0], (squeeze_planes, inplanes, 1, 1), jnp.float32)
    b_sq = 0.1 * jax.random.normal(ks[1], (squeeze_planes,), jnp.float32)
    w_e1 = 0.1 * jax.random.normal(ks[2], (e1_planes, squeeze_planes, 1, 1), jnp.float32)
    b_e1 = 0.1 * jax.random.normal(ks[3], (e1_planes,), jnp.float32)
    w_e3 = 0.1 * jax.random.normal(ks[4], (e3_planes, squeeze_planes, 3, 3), jnp.float32)
    b_e3 = 0.1 * jax.random.normal(ks[5], (e3_planes,), jnp.float32)
    return (w_sq, b_sq, w_e1, b_e1, w_e3, b_e3)


if __name__ == "__main__":
    # Fire(inplanes=4, squeeze_planes=8, expand1x1_planes=8, expand3x3_planes=8)
    N, Cin, H, W = 2, 4, 16, 16
    S, E1, E3 = 8, 8, 8

    key = jax.random.PRNGKey(0)
    kx, kp = jax.random.split(key)
    x = jax.random.normal(kx, (N, Cin, H, W), jnp.float32)
    params = make_params(kp, Cin, S, E1, E3)

    # f32 matmul / f32 output path (bf16 paths available on v6e/v7x via
    # matmul_dtype=jnp.bfloat16 and out_dtype=jnp.bfloat16).
    out = jax.block_until_ready(fire_pallas(x, params))
    ref = jax.block_until_ready(fire_reference(x, params))
    assert out.shape == (N, E1 + E3, H, W), out.shape
    assert jnp.allclose(out, ref, atol=1e-5, rtol=1e-5), (
        float(jnp.max(jnp.abs(out - ref))))

    # Also exercise the lane-batched multi-image-per-step path (B > 1).
    x4 = jax.random.normal(jax.random.PRNGKey(1), (4, Cin, H, W), jnp.float32)
    out4 = jax.block_until_ready(fire_pallas(x4, params, images_per_step=2))
    ref4 = jax.block_until_ready(fire_reference(x4, params))
    assert jnp.allclose(out4, ref4, atol=1e-5, rtol=1e-5), (
        float(jnp.max(jnp.abs(out4 - ref4))))

    print("KERNEL_OK")
</pallas_src>

<mosaic_0001>
module attributes {stable_mosaic.version = 11 : i64} {
  func.func @fire_kernel(%arg0: i32, %arg1: memref<1x4x256xf32, #tpu.memory_space<vmem>>, %arg2: memref<8x4xf32, #tpu.memory_space<vmem>>, %arg3: memref<8x1xf32, #tpu.memory_space<vmem>>, %arg4: memref<16x72xf32, #tpu.memory_space<vmem>>, %arg5: memref<16x1xf32, #tpu.memory_space<vmem>>, %arg6: memref<9x256xf32, #tpu.memory_space<vmem>>, %arg7: memref<1x16x256xf32, #tpu.memory_space<vmem>>, %arg8: memref<4x256xf32, #tpu.memory_space<vmem>>, %arg9: memref<72x256xf32, #tpu.memory_space<vmem>>) attributes {dimension_semantics = [#tpu.dimension_semantics<parallel>], iteration_bounds = array<i64: 2>, scalar_prefetch = 0 : i64, scratch_operands = 2 : i64, tpu.core_type = #tpu.core_type<tc>, window_params = [{transform_indices = @transform_0, window_bounds = array<i64: 1, 4, 256>}, {pipeline_mode = #tpu.pipeline_mode<synchronous>, transform_indices = @transform_1, window_bounds = array<i64: 8, 4>}, {pipeline_mode = #tpu.pipeline_mode<synchronous>, transform_indices = @transform_2, window_bounds = array<i64: 8, 1>}, {pipeline_mode = #tpu.pipeline_mode<synchronous>, transform_indices = @transform_3, window_bounds = array<i64: 16, 72>}, {pipeline_mode = #tpu.pipeline_mode<synchronous>, transform_indices = @transform_4, window_bounds = array<i64: 16, 1>}, {pipeline_mode = #tpu.pipeline_mode<synchronous>, transform_indices = @transform_5, window_bounds = array<i64: 9, 256>}, {transform_indices = @transform_6, window_bounds = array<i64: 1, 16, 256>}]} {
    %c0 = arith.constant 0 : index
    %c0_0 = arith.constant 0 : index
    %c0_1 = arith.constant 0 : index
    %0 = vector.load %arg1[%c0, %c0_0, %c0_1] : memref<1x4x256xf32, #tpu.memory_space<vmem>>, vector<1x4x256xf32>
    %1 = vector.shape_cast %0 : vector<1x4x256xf32> to vector<4x256xf32>
    %c0_2 = arith.constant 0 : index
    %c0_3 = arith.constant 0 : index
    %2 = vector.load %arg8[%c0_2, %c0_3] : memref<4x256xf32, #tpu.memory_space<vmem>>, vector<4x256xf32>
    tpu.vector_store %arg8[%c0_2, %c0_3], %1 {strides = array<i32>} : memref<4x256xf32, #tpu.memory_space<vmem>>, vector<4x256xf32>,
    %c0_4 = arith.constant 0 : index
    %c0_5 = arith.constant 0 : index
    %3 = vector.load %arg2[%c0_4, %c0_5] : memref<8x4xf32, #tpu.memory_space<vmem>>, vector<8x4xf32>
    %c0_6 = arith.constant 0 : index
    %c0_7 = arith.constant 0 : index
    %4 = vector.load %arg8[%c0_6, %c0_7] : memref<4x256xf32, #tpu.memory_space<vmem>>, vector<4x256xf32>
    %cst = arith.constant dense<0.000000e+00> : vector<8x256xf32>
    %5 = tpu.matmul %3, %4, %cst {dimension_numbers = #tpu.dot_dimension_numbers<[1], [0], [0], [1], [0, 0, 1, 1], [], []>} : vector<8x4xf32>, vector<4x256xf32>, vector<8x256xf32> -> vector<8x256xf32>
    %c0_8 = arith.constant 0 : index
    %c0_9 = arith.constant 0 : index
    %6 = vector.load %arg3[%c0_8, %c0_9] : memref<8x1xf32, #tpu.memory_space<vmem>>, vector<8x1xf32>
    %7 = vector.broadcast %6 : vector<8x1xf32> to vector<8x256xf32>
    %8 = arith.addf %5, %7 : vector<8x256xf32>
    %cst_10 = arith.constant 0.000000e+00 : f32
    %9 = vector.broadcast %cst_10 : f32 to vector<8x256xf32>
    %10 = arith.maximumf %8, %9 : vector<8x256xf32>
    %c17_i32 = arith.constant 17 : i32
    %11 = tpu.dynamic_rotate %10 by %c17_i32 dim 1 : vector<8x256xf32>, i32 -> vector<8x256xf32>
    %c0_11 = arith.constant 0 : index
    %c0_12 = arith.constant 0 : index
    %12 = vector.load %arg6[%c0_11, %c0_12] : memref<9x256xf32, #tpu.memory_space<vmem>>, vector<1x256xf32>
    %cst_13 = arith.constant 0.000000e+00 : f32
    %13 = vector.broadcast %cst_13 : f32 to vector<1x256xf32>
    %14 = arith.cmpf one, %12, %13 : vector<1x256xf32>
    %cst_14 = arith.constant 0.000000e+00 : f32
    %15 = vector.shape_cast %14 : vector<1x256xi1> to vector<1x256xi1>
    %16 = vector.broadcast %15 : vector<1x256xi1> to vector<8x256xi1>
    %17 = vector.broadcast %cst_14 : f32 to vector<8x256xf32>
    %18 = arith.select %16, %11, %17 : vector<8x256xi1>, vector<8x256xf32>
    %c0_15 = arith.constant 0 : index
    %c0_16 = arith.constant 0 : index
    %19 = vector.load %arg9[%c0_15, %c0_16] : memref<72x256xf32, #tpu.memory_space<vmem>>, vector<8x256xf32>
    tpu.vector_store %arg9[%c0_15, %c0_16], %18 {strides = array<i32>} : memref<72x256xf32, #tpu.memory_space<vmem>>, vector<8x256xf32>,
    %c16_i32 = arith.constant 16 : i32
    %20 = tpu.dynamic_rotate %10 by %c16_i32 dim 1 : vector<8x256xf32>, i32 -> vector<8x256xf32>
    %c1 = arith.constant 1 : index
    %c0_17 = arith.constant 0 : index
    %21 = vector.load %arg6[%c1, %c0_17] : memref<9x256xf32, #tpu.memory_space<vmem>>, vector<1x256xf32>
    %cst_18 = arith.constant 0.000000e+00 : f32
    %22 = vector.broadcast %cst_18 : f32 to vector<1x256xf32>
    %23 = arith.cmpf one, %21, %22 : vector<1x256xf32>
    %cst_19 = arith.constant 0.000000e+00 : f32
    %24 = vector.shape_cast %23 : vector<1x256xi1> to vector<1x256xi1>
    %25 = vector.broadcast %24 : vector<1x256xi1> to vector<8x256xi1>
    %26 = vector.broadcast %cst_19 : f32 to vector<8x256xf32>
    %27 = arith.select %25, %20, %26 : vector<8x256xi1>, vector<8x256xf32>
    %c8 = arith.constant 8 : index
    %c0_20 = arith.constant 0 : index
    %28 = vector.load %arg9[%c8, %c0_20] : memref<72x256xf32, #tpu.memory_space<vmem>>, vector<8x256xf32>
    tpu.vector_store %arg9[%c8, %c0_20], %27 {strides = array<i32>} : memref<72x256xf32, #tpu.memory_space<vmem>>, vector<8x256xf32>,
    %c15_i32 = arith.constant 15 : i32
    %29 = tpu.dynamic_rotate %10 by %c15_i32 dim 1 : vector<8x256xf32>, i32 -> vector<8x256xf32>
    %c2 = arith.constant 2 : index
    %c0_21 = arith.constant 0 : index
    %30 = vector.load %arg6[%c2, %c0_21] : memref<9x256xf32, #tpu.memory_space<vmem>>, vector<1x256xf32>
    %cst_22 = arith.constant 0.000000e+00 : f32
    %31 = vector.broadcast %cst_22 : f32 to vector<1x256xf32>
    %32 = arith.cmpf one, %30, %31 : vector<1x256xf32>
    %cst_23 = arith.constant 0.000000e+00 : f32
    %33 = vector.shape_cast %32 : vector<1x256xi1> to vector<1x256xi1>
    %34 = vector.broadcast %33 : vector<1x256xi1> to vector<8x256xi1>
    %35 = vector.broadcast %cst_23 : f32 to vector<8x256xf32>
    %36 = arith.select %34, %29, %35 : vector<8x256xi1>, vector<8x256xf32>
    %c16 = arith.constant 16 : index
    %c0_24 = arith.constant 0 : index
    %37 = vector.load %arg9[%c16, %c0_24] : memref<72x256xf32, #tpu.memory_space<vmem>>, vector<8x256xf32>
    tpu.vector_store %arg9[%c16, %c0_24], %36 {strides = array<i32>} : memref<72x256xf32, #tpu.memory_space<vmem>>, vector<8x256xf32>,
    %c1_i32 = arith.constant 1 : i32
    %38 = tpu.dynamic_rotate %10 by %c1_i32 dim 1 : vector<8x256xf32>, i32 -> vector<8x256xf32>
    %c3 = arith.constant 3 : index
    %c0_25 = arith.constant 0 : index
    %39 = vector.load %arg6[%c3, %c0_25] : memref<9x256xf32, #tpu.memory_space<vmem>>, vector<1x256xf32>
    %cst_26 = arith.constant 0.000000e+00 : f32
    %40 = vector.broadcast %cst_26 : f32 to vector<1x256xf32>
    %41 = arith.cmpf one, %39, %40 : vector<1x256xf32>
    %cst_27 = arith.constant 0.000000e+00 : f32
    %42 = vector.shape_cast %41 : vector<1x256xi1> to vector<1x256xi1>
    %43 = vector.broadcast %42 : vector<1x256xi1> to vector<8x256xi1>
    %44 = vector.broadcast %cst_27 : f32 to vector<8x256xf32>
    %45 = arith.select %43, %38, %44 : vector<8x256xi1>, vector<8x256xf32>
    %c24 = arith.constant 24 : index
    %c0_28 = arith.constant 0 : index
    %46 = vector.load %arg9[%c24, %c0_28] : memref<72x256xf32, #tpu.memory_space<vmem>>, vector<8x256xf32>
    tpu.vector_store %arg9[%c24, %c0_28], %45 {strides = array<i32>} : memref<72x256xf32, #tpu.memory_space<vmem>>, vector<8x256xf32>,
    %c32 = arith.constant 32 : index
    %c0_29 = arith.constant 0 : index
    %47 = vector.load %arg9[%c32, %c0_29] : memref<72x256xf32, #tpu.memory_space<vmem>>, vector<8x256xf32>
    tpu.vector_store %arg9[%c32, %c0_29], %10 {strides = array<i32>} : memref<72x256xf32, #tpu.memory_space<vmem>>, vector<8x256xf32>,
    %c255_i32 = arith.constant 255 : i32
    %48 = tpu.dynamic_rotate %10 by %c255_i32 dim 1 : vector<8x256xf32>, i32 -> vector<8x256xf32>
    %c5 = arith.constant 5 : index
    %c0_30 = arith.constant 0 : index
    %49 = vector.load %arg6[%c5, %c0_30] : memref<9x256xf32, #tpu.memory_space<vmem>>, vector<1x256xf32>
    %cst_31 = arith.constant 0.000000e+00 : f32
    %50 = vector.broadcast %cst_31 : f32 to vector<1x256xf32>
    %51 = arith.cmpf one, %49, %50 : vector<1x256xf32>
    %cst_32 = arith.constant 0.000000e+00 : f32
    %52 = vector.shape_cast %51 : vector<1x256xi1> to vector<1x256xi1>
    %53 = vector.broadcast %52 : vector<1x256xi1> to vector<8x256xi1>
    %54 = vector.broadcast %cst_32 : f32 to vector<8x256xf32>
    %55 = arith.select %53, %48, %54 : vector<8x256xi1>, vector<8x256xf32>
    %c40 = arith.constant 40 : index
    %c0_33 = arith.constant 0 : index
    %56 = vector.load %arg9[%c40, %c0_33] : memref<72x256xf32, #tpu.memory_space<vmem>>, vector<8x256xf32>
    tpu.vector_store %arg9[%c40, %c0_33], %55 {strides = array<i32>} : memref<72x256xf32, #tpu.memory_space<vmem>>, vector<8x256xf32>,
    %c241_i32 = arith.constant 241 : i32
    %57 = tpu.dynamic_rotate %10 by %c241_i32 dim 1 : vector<8x256xf32>, i32 -> vector<8x256xf32>
    %c6 = arith.constant 6 : index
    %c0_34 = arith.constant 0 : index
    %58 = vector.load %arg6[%c6, %c0_34] : memref<9x256xf32, #tpu.memory_space<vmem>>, vector<1x256xf32>
    %cst_35 = arith.constant 0.000000e+00 : f32
    %59 = vector.broadcast %cst_35 : f32 to vector<1x256xf32>
    %60 = arith.cmpf one, %58, %59 : vector<1x256xf32>
    %cst_36 = arith.constant 0.000000e+00 : f32
    %61 = vector.shape_cast %60 : vector<1x256xi1> to vector<1x256xi1>
    %62 = vector.broadcast %61 : vector<1x256xi1> to vector<8x256xi1>
    %63 = vector.broadcast %cst_36 : f32 to vector<8x256xf32>
    %64 = arith.select %62, %57, %63 : vector<8x256xi1>, vector<8x256xf32>
    %c48 = arith.constant 48 : index
    %c0_37 = arith.constant 0 : index
    %65 = vector.load %arg9[%c48, %c0_37] : memref<72x256xf32, #tpu.memory_space<vmem>>, vector<8x256xf32>
    tpu.vector_store %arg9[%c48, %c0_37], %64 {strides = array<i32>} : memref<72x256xf32, #tpu.memory_space<vmem>>, vector<8x256xf32>,
    %c240_i32 = arith.constant 240 : i32
    %66 = tpu.dynamic_rotate %10 by %c240_i32 dim 1 : vector<8x256xf32>, i32 -> vector<8x256xf32>
    %c7 = arith.constant 7 : index
    %c0_38 = arith.constant 0 : index
    %67 = vector.load %arg6[%c7, %c0_38] : memref<9x256xf32, #tpu.memory_space<vmem>>, vector<1x256xf32>
    %cst_39 = arith.constant 0.000000e+00 : f32
    %68 = vector.broadcast %cst_39 : f32 to vector<1x256xf32>
    %69 = arith.cmpf one, %67, %68 : vector<1x256xf32>
    %cst_40 = arith.constant 0.000000e+00 : f32
    %70 = vector.shape_cast %69 : vector<1x256xi1> to vector<1x256xi1>
    %71 = vector.broadcast %70 : vector<1x256xi1> to vector<8x256xi1>
    %72 = vector.broadcast %cst_40 : f32 to vector<8x256xf32>
    %73 = arith.select %71, %66, %72 : vector<8x256xi1>, vector<8x256xf32>
    %c56 = arith.constant 56 : index
    %c0_41 = arith.constant 0 : index
    %74 = vector.load %arg9[%c56, %c0_41] : memref<72x256xf32, #tpu.memory_space<vmem>>, vector<8x256xf32>
    tpu.vector_store %arg9[%c56, %c0_41], %73 {strides = array<i32>} : memref<72x256xf32, #tpu.memory_space<vmem>>, vector<8x256xf32>,
    %c239_i32 = arith.constant 239 : i32
    %75 = tpu.dynamic_rotate %10 by %c239_i32 dim 1 : vector<8x256xf32>, i32 -> vector<8x256xf32>
    %c8_42 = arith.constant 8 : index
    %c0_43 = arith.constant 0 : index
    %76 = vector.load %arg6[%c8_42, %c0_43] : memref<9x256xf32, #tpu.memory_space<vmem>>, vector<1x256xf32>
    %cst_44 = arith.constant 0.000000e+00 : f32
    %77 = vector.broadcast %cst_44 : f32 to vector<1x256xf32>
    %78 = arith.cmpf one, %76, %77 : vector<1x256xf32>
    %cst_45 = arith.constant 0.000000e+00 : f32
    %79 = vector.shape_cast %78 : vector<1x256xi1> to vector<1x256xi1>
    %80 = vector.broadcast %79 : vector<1x256xi1> to vector<8x256xi1>
    %81 = vector.broadcast %cst_45 : f32 to vector<8x256xf32>
    %82 = arith.select %80, %75, %81 : vector<8x256xi1>, vector<8x256xf32>
    %c64 = arith.constant 64 : index
    %c0_46 = arith.constant 0 : index
    %83 = vector.load %arg9[%c64, %c0_46] : memref<72x256xf32, #tpu.memory_space<vmem>>, vector<8x256xf32>
    tpu.vector_store %arg9[%c64, %c0_46], %82 {strides = array<i32>} : memref<72x256xf32, #tpu.memory_space<vmem>>, vector<8x256xf32>,
    %c0_47 = arith.constant 0 : index
    %c0_48 = arith.constant 0 : index
    %84 = vector.load %arg4[%c0_47, %c0_48] : memref<16x72xf32, #tpu.memory_space<vmem>>, vector<16x72xf32>
    %c0_49 = arith.constant 0 : index
    %c0_50 = arith.constant 0 : index
    %85 = vector.load %arg9[%c0_49, %c0_50] : memref<72x256xf32, #tpu.memory_space<vmem>>, vector<72x256xf32>
    %cst_51 = arith.constant dense<0.000000e+00> : vector<16x256xf32>
    %86 = tpu.matmul %84, %85, %cst_51 {dimension_numbers = #tpu.dot_dimension_numbers<[1], [0], [0], [1], [0, 0, 1, 1], [], []>} : vector<16x72xf32>, vector<72x256xf32>, vector<16x256xf32> -> vector<16x256xf32>
    %c0_52 = arith.constant 0 : index
    %c0_53 = arith.constant 0 : index
    %87 = vector.load %arg5[%c0_52, %c0_53] : memref<16x1xf32, #tpu.memory_space<vmem>>, vector<16x1xf32>
    %88 = vector.broadcast %87 : vector<16x1xf32> to vector<16x256xf32>
    %89 = arith.addf %86, %88 : vector<16x256xf32>
    %cst_54 = arith.constant 0.000000e+00 : f32
    %90 = vector.broadcast %cst_54 : f32 to vector<16x256xf32>
    %91 = arith.maximumf %89, %90 : vector<16x256xf32>
    %c0_55 = arith.constant 0 : index
    %c0_56 = arith.constant 0 : index
    %c0_57 = arith.constant 0 : index
    %92 = vector.load %arg7[%c0_55, %c0_56, %c0_57] : memref<1x16x256xf32, #tpu.memory_space<vmem>>, vector<1x16x256xf32>
    %93 = vector.shape_cast %92 : vector<1x16x256xf32> to vector<16x256xf32>
    %94 = vector.shape_cast %91 : vector<16x256xf32> to vector<1x16x256xf32>
    tpu.vector_store %arg7[%c0_55, %c0_56, %c0_57], %94 {strides = array<i32>} : memref<1x16x256xf32, #tpu.memory_space<vmem>>, vector<1x16x256xf32>,
    return
  }
  func.func @transform_0(%arg0: i32) -> (i32, i32, i32) {
    %c0_i32 = arith.constant 0 : i32
    %c0_i32_0 = arith.constant 0 : i32
    %c0_i32_1 = arith.constant 0 : i32
    return %arg0, %c0_i32, %c0_i32_0 : i32, i32, i32
  }
  func.func @transform_1(%arg0: i32) -> (i32, i32) {
    %c0_i32 = arith.constant 0 : i32
    %c0_i32_0 = arith.constant 0 : i32
    %c0_i32_1 = arith.constant 0 : i32
    return %c0_i32, %c0_i32_0 : i32, i32
  }
  func.func @transform_2(%arg0: i32) -> (i32, i32) {
    %c0_i32 = arith.constant 0 : i32
    %c0_i32_0 = arith.constant 0 : i32
    %c0_i32_1 = arith.constant 0 : i32
    return %c0_i32, %c0_i32_0 : i32, i32
  }
  func.func @transform_3(%arg0: i32) -> (i32, i32) {
    %c0_i32 = arith.constant 0 : i32
    %c0_i32_0 = arith.constant 0 : i32
    %c0_i32_1 = arith.constant 0 : i32
    return %c0_i32, %c0_i32_0 : i32, i32
  }
  func.func @transform_4(%arg0: i32) -> (i32, i32) {
    %c0_i32 = arith.constant 0 : i32
    %c0_i32_0 = arith.constant 0 : i32
    %c0_i32_1 = arith.constant 0 : i32
    return %c0_i32, %c0_i32_0 : i32, i32
  }
  func.func @transform_5(%arg0: i32) -> (i32, i32) {
    %c0_i32 = arith.constant 0 : i32
    %c0_i32_0 = arith.constant 0 : i32
    %c0_i32_1 = arith.constant 0 : i32
    return %c0_i32, %c0_i32_0 : i32, i32
  }
  func.func @transform_6(%arg0: i32) -> (i32, i32, i32) {
    %c0_i32 = arith.constant 0 : i32
    %c0_i32_0 = arith.constant 0 : i32
    %c0_i32_1 = arith.constant 0 : i32
    return %arg0, %c0_i32, %c0_i32_0 : i32, i32, i32
  }
}

</mosaic_0001>

<llo_original>
// kernel: tpu_custom_call.1
$region0: #{tpu_custom_call.1}
  #allocation0 [shape = 'u32[]', space=smem, size = 0x4, offset = 0x4, fixed_abs, tag = 'smem constant byte address 0x4 - core index']
  #allocation1 [shape = 'u32[72,128]{1,0:T(1,128)}', space=vmem, size = 0x9000, scoped, tag = 'internal scratch']
  #allocation2 [shape = 'f32[4,256]{1,0:T(4,128)}', space=vmem, size = 0x1000, scoped, tag = 'scratch operand']
  #allocation3 [shape = 'f32[72,256]{1,0:T(8,128)}', space=vmem, size = 0x12000, scoped, tag = 'scratch operand']
  %s0 = inlined_call_operand.vmem [shape: f32[2,4,256], index: 0, kind: input, shape index: {}]
  %s1 = inlined_call_operand.vmem [shape: f32[8,4], index: 1, kind: input, shape index: {}]
  %s2 = inlined_call_operand.vmem [shape: f32[8,1], index: 2, kind: input, shape index: {}]
  %s3 = inlined_call_operand.vmem [shape: f32[16,72], index: 3, kind: input, shape index: {}]
  %s4 = inlined_call_operand.vmem [shape: f32[16,1], index: 4, kind: input, shape index: {}]
  %s5 = inlined_call_operand.hbm [shape: f32[9,256], index: 5, kind: input, shape index: {}]
  %s6 = inlined_call_operand.hbm [shape: f32[2,16,256], index: 6, kind: output, shape index: {}]
  %s7 = sld [smem:[#allocation0]]
  $region61: #{tpu_custom_call.1} parent=0
    _
  %s9 = ssub.s32 1, %s7
  %s10 = scalar_select 0, %s9, %s7
  $region1: #{tpu_custom_call.1} parent=0
    #allocation4 [shape = 'u8[16384]{0}', space=vmem, size = 0x4000, scoped, tag = 'input window, operand 5, single buffered']
    #allocation5 [shape = 's32[2]{0}', space=sflag, size = 0x8, scoped, tag = 'scoped memory for tpu_custom_call.1']
    #allocation6 [shape = 's32[2]{0}', space=sflag, size = 0x8, scoped, tag = 'scoped memory for tpu_custom_call.1']
    #allocation7 [shape = 'u8[32768]{0}', space=vmem, size = 0x8000, scoped, tag = 'output window, operand 0']
    %11 = vsyncpa [#allocation5], 0
    %12 = vsyncpa [#allocation6], 0
    %s13 = scalar_lea.sflag [#allocation6], 1
    %14 = vsyncpa %s13, 0
    loop: start=0, step=1, limit=4
    $region2: #{tpu_custom_call.1} parent=1 // loop_pre_header
      _
    $region3: #{tpu_custom_call.1} parent=1 // loop_header
      %s16 = sphi 0, %s20
      %p17 = scmp.ge.s32.totalorder %s16, 4
      %s26 = sphi 0, %s28
      %s29 = sphi 0, %s26
      %s30 = sphi 0, %s29
      %s46 = sphi 0, %s30
      %s50 = sphi 0, %s50
      %s52 = sphi 0, %s50
      %s53 = sphi 0, %s52
      %s67 = sphi 0, %s53
      %s71 = sphi 0, %s71
      %s73 = sphi 0, %s71
      %s74 = sphi 0, %s73
      %s88 = sphi 0, %s74
      %s92 = sphi 0, %s92
      %s94 = sphi 0, %s92
      %s95 = sphi 0, %s94
      %s109 = sphi 0, %s95
      %s113 = sphi 0, %s113
      %s115 = sphi 0, %s113
      %s116 = sphi 0, %s115
      %s130 = sphi 0, %s116
      %s134 = sphi 0, %s134
      %s136 = sphi 0, %s134
      %s137 = sphi 0, %s136
      %s151 = sphi 0, %s137
      %s157 = sphi 0, %s159
      %s160 = sphi 0, %s157
      %s161 = sphi 0, %s160
      %s177 = sphi 0, %s161
    $region4: #{tpu_custom_call.1} parent=1 // loop_header_branch
      %19 = sbr.rel (%p17) target = $region8
    $region5: #{tpu_custom_call.1} parent=1 // loop_body
      %s21 = ssub.s32 %s16, 1
      %s22 = ssub.s32 %s16, 2
      %s23 = sadd.s32 %s16, 1
      %s24 = ssub.s32 %s16, %s23
      %p25 = scmp.eq.s32.totalorder %s24, 0
      %s27 = sadd.s32 %s26, 1
      %s28 = scalar_select %p25, %s26, %s27
      %p31 = pneg %p25
      %p32 = scmp.eq.s32.totalorder %s16, 1
      %p33 = por %p31, %p32
      %p34 = scmp.ne.s32.totalorder %s26, %s29
      %p35 = scmp.eq.s32.totalorder %s16, 0
      %p36 = por %p34, %p35
      %p37 = scmp.ne.s32.totalorder %s26, %s29
      %p38 = scmp.eq.s32.totalorder %s21, 1
      %p39 = por %p37, %p38
      %p40 = scmp.ne.s32.totalorder %s29, %s30
      %p41 = scmp.eq.s32.totalorder %s21, 0
      %p42 = por %p40, %p41
      %p43 = scmp.ne.s32.totalorder %s29, %s30
      %p44 = scmp.eq.s32.totalorder %s22, 1
      %p45 = por %p43, %p44
      %p47 = scmp.ne.s32.totalorder %s30, %s46
      %p48 = scmp.eq.s32.totalorder %s22, 0
      %p49 = por %p47, %p48
      %s51 = sadd.s32 %s50, 1
      %p54 = scmp.eq.s32.totalorder %s16, 1
      %p55 = scmp.ne.s32.totalorder %s50, %s52
      %p56 = scmp.eq.s32.totalorder %s16, 0
      %p57 = por %p55, %p56
      %p58 = scmp.ne.s32.totalorder %s50, %s52
      %p59 = scmp.eq.s32.totalorder %s21, 1
      %p60 = por %p58, %p59
      %p61 = scmp.ne.s32.totalorder %s52, %s53
      %p62 = scmp.eq.s32.totalorder %s21, 0
      %p63 = por %p61, %p62
      %p64 = scmp.ne.s32.totalorder %s52, %s53
      %p65 = scmp.eq.s32.totalorder %s22, 1
      %p66 = por %p64, %p65
      %p68 = scmp.ne.s32.totalorder %s53, %s67
      %p69 = scmp.eq.s32.totalorder %s22, 0
      %p70 = por %p68, %p69
      %s72 = sadd.s32 %s71, 1
      %p75 = scmp.eq.s32.totalorder %s16, 1
      %p76 = scmp.ne.s32.totalorder %s71, %s73
      %p77 = scmp.eq.s32.totalorder %s16, 0
      %p78 = por %p76, %p77
      %p79 = scmp.ne.s32.totalorder %s71, %s73
      %p80 = scmp.eq.s32.totalorder %s21, 1
      %p81 = por %p79, %p80
      %p82 = scmp.ne.s32.totalorder %s73, %s74
      %p83 = scmp.eq.s32.totalorder %s21, 0
      %p84 = por %p82, %p83
      %p85 = scmp.ne.s32.totalorder %s73, %s74
      %p86 = scmp.eq.s32.totalorder %s22, 1
      %p87 = por %p85, %p86
      %p89 = scmp.ne.s32.totalorder %s74, %s88
      %p90 = scmp.eq.s32.totalorder %s22, 0
      %p91 = por %p89, %p90
      %s93 = sadd.s32 %s92, 1
      %p96 = scmp.eq.s32.totalorder %s16, 1
      %p97 = scmp.ne.s32.totalorder %s92, %s94
      %p98 = scmp.eq.s32.totalorder %s16, 0
      %p99 = por %p97, %p98
      %p100 = scmp.ne.s32.totalorder %s92, %s94
      %p101 = scmp.eq.s32.totalorder %s21, 1
      %p102 = por %p100, %p101
      %p103 = scmp.ne.s32.totalorder %s94, %s95
      %p104 = scmp.eq.s32.totalorder %s21, 0
      %p105 = por %p103, %p104
      %p106 = scmp.ne.s32.totalorder %s94, %s95
      %p107 = scmp.eq.s32.totalorder %s22, 1
      %p108 = por %p106, %p107
      %p110 = scmp.ne.s32.totalorder %s95, %s109
      %p111 = scmp.eq.s32.totalorder %s22, 0
      %p112 = por %p110, %p111
      %s114 = sadd.s32 %s113, 1
      %p117 = scmp.eq.s32.totalorder %s16, 1
      %p118 = scmp.ne.s32.totalorder %s113, %s115
      %p119 = scmp.eq.s32.totalorder %s16, 0
      %p120 = por %p118, %p119
      %p121 = scmp.ne.s32.totalorder %s113, %s115
      %p122 = scmp.eq.s32.totalorder %s21, 1
      %p123 = por %p121, %p122
      %p124 = scmp.ne.s32.totalorder %s115, %s116
      %p125 = scmp.eq.s32.totalorder %s21, 0
      %p126 = por %p124, %p125
      %p127 = scmp.ne.s32.totalorder %s115, %s116
      %p128 = scmp.eq.s32.totalorder %s22, 1
      %p129 = por %p127, %p128
      %p131 = scmp.ne.s32.totalorder %s116, %s130
      %p132 = scmp.eq.s32.totalorder %s22, 0
      %p133 = por %p131, %p132
      %s135 = sadd.s32 %s134, 1
      %p138 = scmp.eq.s32.totalorder %s16, 1
      %p139 = scmp.ne.s32.totalorder %s134, %s136
      %p140 = scmp.eq.s32.totalorder %s16, 0
      %p141 = por %p139, %p140
      %p142 = scmp.ne.s32.totalorder %s134, %s136
      %p143 = scmp.eq.s32.totalorder %s21, 1
      %p144 = por %p142, %p143
      %p145 = scmp.ne.s32.totalorder %s136, %s137
      %p146 = scmp.eq.s32.totalorder %s21, 0
      %p147 = por %p145, %p146
      %p148 = scmp.ne.s32.totalorder %s136, %s137
      %p149 = scmp.eq.s32.totalorder %s22, 1
      %p150 = por %p148, %p149
      %p152 = scmp.ne.s32.totalorder %s137, %s151
      %p153 = scmp.eq.s32.totalorder %s22, 0
      %p154 = por %p152, %p153
      %s155 = ssub.s32 %s16, %s23
      %p156 = scmp.eq.s32.totalorder %s155, 0
      %s158 = sadd.s32 %s157, 1
      %s159 = scalar_select %p156, %s157, %s158
      %p162 = pneg %p156
      %p163 = scmp.eq.s32.totalorder %s16, 1
      %p164 = por %p162, %p163
      %p165 = scmp.ne.s32.totalorder %s157, %s160
      %p166 = scmp.eq.s32.totalorder %s16, 0
      %p167 = por %p165, %p166
      %p168 = scmp.ne.s32.totalorder %s157, %s160
      %p169 = scmp.eq.s32.totalorder %s21, 1
      %p170 = por %p168, %p169
      %p171 = scmp.ne.s32.totalorder %s160, %s161
      %p172 = scmp.eq.s32.totalorder %s21, 0
      %p173 = por %p171, %p172
      %p174 = scmp.ne.s32.totalorder %s160, %s161
      %p175 = scmp.eq.s32.totalorder %s22, 1
      %p176 = por %p174, %p175
      %p178 = scmp.ne.s32.totalorder %s161, %s177
      %p179 = scmp.eq.s32.totalorder %s22, 0
      %p180 = por %p178, %p179
      %p181 = scmp.le.s32.totalorder 1, %s16
      %p182 = scmp.lt.s32.totalorder %s16, 3
      %p183 = pnand %p181, %p182
      %p184 = pneg %p183
      // Predicated region
      $region9: #{tpu_custom_call.1} parent=5 // pred_check
        _
      $region10: #{tpu_custom_call.1} parent=5 // pred_check_branch
        %186 = sbr.rel (%p183) target = $region12
      $region11: #{tpu_custom_call.1} parent=5 // pred_region
        %s187 = ssub.s32 %s16, 1
        // Predicated region
        $region13: #{tpu_custom_call.1} parent=11 // pred_check
          %p188 = pneg %p63
        $region14: #{tpu_custom_call.1} parent=11 // pred_check_branch
          %190 = sbr.rel (%p188) target = $region16
        $region15: #{tpu_custom_call.1} parent=11 // pred_region
          _
        $region16: #{tpu_custom_call.1} parent=11 // pred_fallthru
          _
        // Predicated region
        $region17: #{tpu_custom_call.1} parent=11 // pred_check
          %p191 = pneg %p84
        $region18: #{tpu_custom_call.1} parent=11 // pred_check_branch
          %193 = sbr.rel (%p191) target = $region20
        $region19: #{tpu_custom_call.1} parent=11 // pred_region
          _
        $region20: #{tpu_custom_call.1} parent=11 // pred_fallthru
          _
        // Predicated region
        $region21: #{tpu_custom_call.1} parent=11 // pred_check
          %p194 = pneg %p105
        $region22: #{tpu_custom_call.1} parent=11 // pred_check_branch
          %196 = sbr.rel (%p194) target = $region24
        $region23: #{tpu_custom_call.1} parent=11 // pred_region
          _
        $region24: #{tpu_custom_call.1} parent=11 // pred_fallthru
          _
        // Predicated region
        $region25: #{tpu_custom_call.1} parent=11 // pred_check
          %p197 = pneg %p126
        $region26: #{tpu_custom_call.1} parent=11 // pred_check_branch
          %199 = sbr.rel (%p197) target = $region28
        $region27: #{tpu_custom_call.1} parent=11 // pred_region
          _
        $region28: #{tpu_custom_call.1} parent=11 // pred_fallthru
          _
        // Predicated region
        $region29: #{tpu_custom_call.1} parent=11 // pred_check
          %p200 = pneg %p147
        $region30: #{tpu_custom_call.1} parent=11 // pred_check_branch
          %202 = sbr.rel (%p200) target = $region32
        $region31: #{tpu_custom_call.1} parent=11 // pred_region
          %204 = vsyncadd [#allocation5], 0
          %s205 = sshll.u32 %s5, 4
          %s206 = int_to_ptr.hbm [resolvable:$true] %s205
          %s207 = sshll.u32 [#allocation4], 4
          %s208 = int_to_ptr.vmem [resolvable:$true] %s207
          %213 = dma.hbm_to_vmem [thread:$0]  %s206, 512, %s208, [#allocation5], 256, 256, 16
        $region32: #{tpu_custom_call.1} parent=11 // pred_fallthru
          _
      $region12: #{tpu_custom_call.1} parent=5 // pred_fallthru
        _
      %p214 = scmp.lt.s32.totalorder %s16, 2
      // Predicated region
      $region33: #{tpu_custom_call.1} parent=5 // pred_check
        %p215 = pneg %p214
      $region34: #{tpu_custom_call.1} parent=5 // pred_check_branch
        %217 = sbr.rel (%p215) target = $region36
      $region35: #{tpu_custom_call.1} parent=5 // pred_region
        // Predicated region
        $region37: #{tpu_custom_call.1} parent=35 // pred_check
          %p218 = pneg %p36
        $region38: #{tpu_custom_call.1} parent=35 // pred_check_branch
          %220 = sbr.rel (%p218) target = $region40
        $region39: #{tpu_custom_call.1} parent=35 // pred_region
          %p221 = scmp.lt.s32.totalorder %s16, 1
          %s222 = scalar_select %p221, %s16, 1
          %s223 = smul.addr %s222, 2
          %s224 = smul.addr %s223, 4
          %s225 = scalar_lea.vmem %s0, %s224
        $region40: #{tpu_custom_call.1} parent=35 // pred_fallthru
          _
      $region36: #{tpu_custom_call.1} parent=5 // pred_fallthru
        _
      %p226 = scmp.le.s32.totalorder 1, %s16
      %p227 = scmp.lt.s32.totalorder %s16, 3
      %p228 = pnand %p226, %p227
      %p229 = pneg %p228
      // Predicated region
      $region41: #{tpu_custom_call.1} parent=5 // pred_check
        _
      $region42: #{tpu_custom_call.1} parent=5 // pred_check_branch
        %231 = sbr.rel (%p228) target = $region44
      $region43: #{tpu_custom_call.1} parent=5 // pred_region
        %s232 = ssub.s32 %s16, 1
        // Predicated region
        $region45: #{tpu_custom_call.1} parent=43 // pred_check
          %p233 = pneg %p147
        $region46: #{tpu_custom_call.1} parent=43 // pred_check_branch
          %235 = sbr.rel (%p233) target = $region48
        $region47: #{tpu_custom_call.1} parent=43 // pred_region
          %237 = dma.done [#allocation5], 512
        $region48: #{tpu_custom_call.1} parent=43 // pred_fallthru
          _
        %p238 = scmp.lt.s32.totalorder %s21, 1
        %s239 = scalar_select %p238, %s21, 1
        %s240 = smul.addr %s239, 2
        %s241 = smul.addr %s240, 4
        %s242 = scalar_lea.vmem %s0, %s241
        %p243 = pneg %p42
        %p244 = pneg %p39
        %p245 = pneg %p63
        %p246 = pneg %p60
        %p247 = pneg %p84
        %p248 = pneg %p81
        %p249 = pneg %p105
        %p250 = pneg %p102
        %p251 = pneg %p126
        %p252 = pneg %p123
        %p253 = pneg %p147
        %p254 = pneg %p144
        %p255 = pneg %p173
        %p256 = pneg %p170
        %s257 = sand.u32 %s160, 1
        %s258 = scalar_lea.sflag [#allocation6], %s257
        %s259 = sand.u32 %s160, 1
        %s260 = smul.addr %s259, 32
        %s261 = scalar_lea.vmem [#allocation7], %s260
        %p262 = scmp.lt.s32.totalorder %s21, 1
        %s263 = scalar_select %p262, %s21, 1
        %s264 = smul.addr %s263, 2
        %s265 = smul.addr %s264, 4
        %s266 = scalar_lea.vmem %s0, %s265
        %v267 = vld [vmem:[%s266] sm:$0xff]
        %268 = vst [vmem:[#allocation2] sm:$0xff] %v267
        %v269 = vld [vmem:[%s1] sm:$0xff]
        %v270 = vld [vmem:[#allocation2] sm:$0xff]
        %v271 = vld [vmem:[%s2] sm:$0xff]
        %273 = vset.pattern.permute.xlu0 0
        %274 = vperm.xlu0 %273, %v271
        %v275 = vpop.permute.xlu0 %274
        %278 = vst [vmem:[#allocation1] ss:$2 sm:$0xff] %v270
        %v279 = vld.sshfl [vmem:[#allocation1] sm:$0xff pattern:$0x75316420]
        %v280 = vld.sshfl [vmem:[#allocation1 + $0x8] sm:$0xff pattern:$0x75316420]
        %vm281 = vcmask 31744
        %v283 = vsel %vm281, %v269, 0
        %vm285 = vcmask 1043456
        %v286 = vsel %vm285, %v279, 0
        %v288 = vsel %vm285, %v280, 0
        %290 = vmatpush.msra.mxu0 0.0
        %291 = vmatpush.msra.mxu0 0.0
        %292 = vmatpush.msra.mxu0 0.0
        %293 = vmatpush.msra.mxu0 0.0
        %294 = vmatpush.msra.mxu0 0.0
        %295 = vmatpush.msra.mxu0 0.0
        %296 = vmatpush.msra.mxu0 0.0
        %297 = vmatpush.msra.mxu0 0.0
        %298 = vmatpush.msra.mxu0 0.0
        %299 = vmatpush.msra.mxu0 0.0
        %300 = vmatpush.msra.mxu0 0.0
        %301 = vmatpush.msra.mxu0 0.0
        %302 = vmatpush.msra.mxu0 0.0
        %303 = vmatpush.msra.mxu0 0.0
        %304 = vmatpush.msra.mxu0 0.0
        %305 = vmatpush.msra.mxu0 %v286
        %306 = vmatmul.f32.gmra.mxu0 %v283
        %v307 = vpop.f32.mrf.mxu0
        %v308 = vadd.f32 %v275, %v307
        %309 = vdwg.mxu0
        %310 = vmatpush.msra.mxu0 0.0
        %311 = vmatpush.msra.mxu0 0.0
        %312 = vmatpush.msra.mxu0 0.0
        %313 = vmatpush.msra.mxu0 0.0
        %314 = vmatpush.msra.mxu0 0.0
        %315 = vmatpush.msra.mxu0 0.0
        %316 = vmatpush.msra.mxu0 0.0
        %317 = vmatpush.msra.mxu0 0.0
        %318 = vmatpush.msra.mxu0 0.0
        %319 = vmatpush.msra.mxu0 0.0
        %320 = vmatpush.msra.mxu0 0.0
        %321 = vmatpush.msra.mxu0 0.0
        %322 = vmatpush.msra.mxu0 0.0
        %323 = vmatpush.msra.mxu0 0.0
        %324 = vmatpush.msra.mxu0 0.0
        %325 = vmatpush.msra.mxu0 %v288
        %326 = vmatmul.f32.gmra.mxu0 %v283
        %v327 = vpop.f32.mrf.mxu0
        %v328 = vadd.f32 %v275, %v327
        %329 = vdwg.mxu0
        %v330 = vmax.f32 %v308, 0.0
        %v331 = vmax.f32 %v328, 0.0
        %332 = vrot.lane.b32.xlu0 %v330, 17
        %v333 = vpop.permute.xlu0 %332
        %334 = vrot.lane.b32.xlu0 %v331, 17
        %v335 = vpop.permute.xlu0 %334
        %v336 = vlaneseq
        %v337 = vand.u32 %v336, 127
        %vm338 = vcmp.lt.s32.totalorder %v337, 17
        %v339 = vsel %vm338, %v333, %v335
        %v340 = vsel %vm338, %v335, %v333
        %v341 = vld [vmem:[#allocation4] ss:$8 sm:$0x3]
        %vm342 = vcmp.ne.f32.partialorder %v341, 0.0
        %v343 = vsel %vm342, 1, 0
        %v344 = vperm.slane %v343, 0
        %v345 = vperm.slane %v343, 1
        %vm346 = vcmp.eq.s32.totalorder %v344, 1
        %vm347 = vcmp.eq.s32.totalorder %v345, 1
        %v348 = vsel %vm346, %v340, 0.0
        %v349 = vsel %vm347, %v339, 0.0
        %350 = vst [vmem:[#allocation3] sm:$0xff] %v348
        %351 = vst [vmem:[#allocation3 + $0x8] sm:$0xff] %v349
        %352 = vrot.lane.b32.xlu0 %v330, 16
        %v353 = vpop.permute.xlu0 %352
        %354 = vrot.lane.b32.xlu0 %v331, 16
        %v355 = vpop.permute.xlu0 %354
        %vm356 = vcmp.lt.s32.totalorder %v337, 16
        %v357 = vsel %vm356, %v353, %v355
        %v358 = vsel %vm356, %v355, %v353
        %s359 = scalar_lea.vmem [#allocation4], 1
        %v360 = vld [vmem:[%s359] ss:$8 sm:$0x3]
        %vm361 = vcmp.ne.f32.partialorder %v360, 0.0
        %v362 = vsel %vm361, 1, 0
        %v363 = vperm.slane %v362, 0
        %v364 = vperm.slane %v362, 1
        %vm365 = vcmp.eq.s32.totalorder %v363, 1
        %vm366 = vcmp.eq.s32.totalorder %v364, 1
        %v367 = vsel %vm365, %v358, 0.0
        %v368 = vsel %vm366, %v357, 0.0
        %369 = vst [vmem:[#allocation3 + $0x10] sm:$0xff] %v367
        %370 = vst [vmem:[#allocation3 + $0x18] sm:$0xff] %v368
        %371 = vrot.lane.b32.xlu0 %v330, 15
        %v372 = vpop.permute.xlu0 %371
        %373 = vrot.lane.b32.xlu0 %v331, 15
        %v374 = vpop.permute.xlu0 %373
        %vm375 = vcmp.lt.s32.totalorder %v337, 15
        %v376 = vsel %vm375, %v372, %v374
        %v377 = vsel %vm375, %v374, %v372
        %s378 = scalar_lea.vmem [#allocation4], 2
        %v379 = vld [vmem:[%s378] ss:$8 sm:$0x3]
        %vm380 = vcmp.ne.f32.partialorder %v379, 0.0
        %v381 = vsel %vm380, 1, 0
        %v382 = vperm.slane %v381, 0
        %v383 = vperm.slane %v381, 1
        %vm384 = vcmp.eq.s32.totalorder %v382, 1
        %vm385 = vcmp.eq.s32.totalorder %v383, 1
        %v386 = vsel %vm384, %v377, 0.0
        %v387 = vsel %vm385, %v376, 0.0
        %388 = vst [vmem:[#allocation3 + $0x20] sm:$0xff] %v386
        %389 = vst [vmem:[#allocation3 + $0x28] sm:$0xff] %v387
        %390 = vrot.lane.b32.xlu0 %v330, 1
        %v391 = vpop.permute.xlu0 %390
        %392 = vrot.lane.b32.xlu0 %v331, 1
        %v393 = vpop.permute.xlu0 %392
        %vm394 = vcmp.lt.s32.totalorder %v337, 1
        %v395 = vsel %vm394, %v391, %v393
        %v396 = vsel %vm394, %v393, %v391
        %s397 = scalar_lea.vmem [#allocation4], 3
        %v398 = vld [vmem:[%s397] ss:$8 sm:$0x3]
        %vm399 = vcmp.ne.f32.partialorder %v398, 0.0
        %v400 = vsel %vm399, 1, 0
        %v401 = vperm.slane %v400, 0
        %v402 = vperm.slane %v400, 1
        %vm403 = vcmp.eq.s32.totalorder %v401, 1
        %vm404 = vcmp.eq.s32.totalorder %v402, 1
        %v405 = vsel %vm403, %v396, 0.0
        %v406 = vsel %vm404, %v395, 0.0
        %407 = vst [vmem:[#allocation3 + $0x30] sm:$0xff] %v405
        %408 = vst [vmem:[#allocation3 + $0x38] sm:$0xff] %v406
        %409 = vst [vmem:[#allocation3 + $0x40] sm:$0xff] %v330
        %410 = vst [vmem:[#allocation3 + $0x48] sm:$0xff] %v331
        %411 = vrot.lane.b32.xlu0 %v330, 127
        %v412 = vpop.permute.xlu0 %411
        %413 = vrot.lane.b32.xlu0 %v331, 127
        %v414 = vpop.permute.xlu0 %413
        %vm415 = vcmp.lt.s32.totalorder %v337, 127
        %v416 = vsel %vm415, %v412, %v414
        %v417 = vsel %vm415, %v414, %v412
        %s418 = scalar_lea.vmem [#allocation4], 5
        %v419 = vld [vmem:[%s418] ss:$8 sm:$0x3]
        %vm420 = vcmp.ne.f32.partialorder %v419, 0.0
        %v421 = vsel %vm420, 1, 0
        %v422 = vperm.slane %v421, 0
        %v423 = vperm.slane %v421, 1
        %vm424 = vcmp.eq.s32.totalorder %v422, 1
        %vm425 = vcmp.eq.s32.totalorder %v423, 1
        %v426 = vsel %vm424, %v416, 0.0
        %v427 = vsel %vm425, %v417, 0.0
        %428 = vst [vmem:[#allocation3 + $0x50] sm:$0xff] %v426
        %429 = vst [vmem:[#allocation3 + $0x58] sm:$0xff] %v427
        %430 = vrot.lane.b32.xlu0 %v330, 113
        %v431 = vpop.permute.xlu0 %430
        %432 = vrot.lane.b32.xlu0 %v331, 113
        %v433 = vpop.permute.xlu0 %432
        %vm434 = vcmp.lt.s32.totalorder %v337, 113
        %v435 = vsel %vm434, %v431, %v433
        %v436 = vsel %vm434, %v433, %v431
        %s437 = scalar_lea.vmem [#allocation4], 6
        %v438 = vld [vmem:[%s437] ss:$8 sm:$0x3]
        %vm439 = vcmp.ne.f32.partialorder %v438, 0.0
        %v440 = vsel %vm439, 1, 0
        %v441 = vperm.slane %v440, 0
        %v442 = vperm.slane %v440, 1
        %vm443 = vcmp.eq.s32.totalorder %v441, 1
        %vm444 = vcmp.eq.s32.totalorder %v442, 1
        %v445 = vsel %vm443, %v435, 0.0
        %v446 = vsel %vm444, %v436, 0.0
        %447 = vst [vmem:[#allocation3 + $0x60] sm:$0xff] %v445
        %448 = vst [vmem:[#allocation3 + $0x68] sm:$0xff] %v446
        %449 = vrot.lane.b32.xlu0 %v330, 112
        %v450 = vpop.permute.xlu0 %449
        %451 = vrot.lane.b32.xlu0 %v331, 112
        %v452 = vpop.permute.xlu0 %451
        %vm453 = vcmp.lt.s32.totalorder %v337, 112
        %v454 = vsel %vm453, %v450, %v452
        %v455 = vsel %vm453, %v452, %v450
        %s456 = scalar_lea.vmem [#allocation4], 7
        %v457 = vld [vmem:[%s456] ss:$8 sm:$0x3]
        %vm458 = vcmp.ne.f32.partialorder %v457, 0.0
        %v459 = vsel %vm458, 1, 0
        %v460 = vperm.slane %v459, 0
        %v461 = vperm.slane %v459, 1
        %vm462 = vcmp.eq.s32.totalorder %v460, 1
        %vm463 = vcmp.eq.s32.totalorder %v461, 1
        %v464 = vsel %vm462, %v454, 0.0
        %v465 = vsel %vm463, %v455, 0.0
        %466 = vst [vmem:[#allocation3 + $0x70] sm:$0xff] %v464
        %467 = vst [vmem:[#allocation3 + $0x78] sm:$0xff] %v465
        %468 = vrot.lane.b32.xlu0 %v330, 111
        %v469 = vpop.permute.xlu0 %468
        %470 = vrot.lane.b32.xlu0 %v331, 111
        %v471 = vpop.permute.xlu0 %470
        %vm472 = vcmp.lt.s32.totalorder %v337, 111
        %v473 = vsel %vm472, %v469, %v471
        %v474 = vsel %vm472, %v471, %v469
        %s475 = scalar_lea.vmem [#allocation4], 16
        %v476 = vld [vmem:[%s475] ss:$8 sm:$0x3]
        %vm477 = vcmp.ne.f32.partialorder %v476, 0.0
        %v478 = vsel %vm477, 1, 0
        %v479 = vperm.slane %v478, 0
        %v480 = vperm.slane %v478, 1
        %vm481 = vcmp.eq.s32.totalorder %v479, 1
        %vm482 = vcmp.eq.s32.totalorder %v480, 1
        %v483 = vsel %vm481, %v473, 0.0
        %v484 = vsel %vm482, %v474, 0.0
        %485 = vst [vmem:[#allocation3 + $0x80] sm:$0xff] %v483
        %486 = vst [vmem:[#allocation3 + $0x88] sm:$0xff] %v484
        %v487 = vld [vmem:[%s3] sm:$0xff]
        %v488 = vld [vmem:[%s3 + $0x8] sm:$0xff]
        %v489 = vld [vmem:[#allocation3] sm:$0xff]
        %v490 = vld [vmem:[#allocation3 + $0x8] sm:$0xff]
        %v491 = vld [vmem:[#allocation3 + $0x10] sm:$0xff]
        %v492 = vld [vmem:[#allocation3 + $0x18] sm:$0xff]
        %v493 = vld [vmem:[#allocation3 + $0x20] sm:$0xff]
        %v494 = vld [vmem:[#allocation3 + $0x28] sm:$0xff]
        %v495 = vld [vmem:[#allocation3 + $0x30] sm:$0xff]
        %v496 = vld [vmem:[#allocation3 + $0x38] sm:$0xff]
        %v497 = vld [vmem:[#allocation3 + $0x40] sm:$0xff]
        %v498 = vld [vmem:[#allocation3 + $0x48] sm:$0xff]
        %v499 = vld [vmem:[#allocation3 + $0x50] sm:$0xff]
        %v500 = vld [vmem:[#allocation3 + $0x58] sm:$0xff]
        %v501 = vld [vmem:[#allocation3 + $0x60] sm:$0xff]
        %v502 = vld [vmem:[#allocation3 + $0x68] sm:$0xff]
        %v503 = vld [vmem:[#allocation3 + $0x70] sm:$0xff]
        %v504 = vld [vmem:[#allocation3 + $0x78] sm:$0xff]
        %v505 = vld [vmem:[#allocation3 + $0x80] sm:$0xff]
        %v506 = vld [vmem:[#allocation3 + $0x88] sm:$0xff]
        %v507 = vld [vmem:[%s4] sm:$0xff]
        %v508 = vld [vmem:[%s4 + $0x8] sm:$0xff]
        %510 = vset.pattern.permute.xlu0 0
        %511 = vperm.xlu0 %510, %v507
        %v512 = vpop.permute.xlu0 %511
        %515 = vset.pattern.permute.xlu0 0
        %516 = vperm.xlu0 %515, %v508
        %v517 = vpop.permute.xlu0 %516
        %vm519 = vcmask 588800
        %v521 = vsel %vm519, %v487, 0
        %v524 = vsel %vm519, %v488, 0
        %526 = vmatpush.msra.mxu0 0.0
        %527 = vmatpush.msra.mxu0 0.0
        %528 = vmatpush.msra.mxu0 0.0
        %529 = vmatpush.msra.mxu0 0.0
        %530 = vmatpush.msra.mxu0 0.0
        %531 = vmatpush.msra.mxu0 0.0
        %532 = vmatpush.msra.mxu0 0.0
        %533 = vmatpush.msra.mxu0 %v505
        %534 = vmatpush.msra.mxu0 %v503
        %535 = vmatpush.msra.mxu0 %v501
        %536 = vmatpush.msra.mxu0 %v499
        %537 = vmatpush.msra.mxu0 %v497
        %538 = vmatpush.msra.mxu0 %v495
        %539 = vmatpush.msra.mxu0 %v493
        %540 = vmatpush.msra.mxu0 %v491
        %541 = vmatpush.msra.mxu0 %v489
        %542 = vmatmul.f32.gmra.mxu0 %v521
        %v543 = vpop.f32.mrf.mxu0
        %v544 = vadd.f32 %v512, %v543
        %545 = vmatmul.f32.gmra.mxu0 %v524
        %v546 = vpop.f32.mrf.mxu0
        %v547 = vadd.f32 %v517, %v546
        %548 = vdwg.mxu0
        %549 = vmatpush.msra.mxu0 0.0
        %550 = vmatpush.msra.mxu0 0.0
        %551 = vmatpush.msra.mxu0 0.0
        %552 = vmatpush.msra.mxu0 0.0
        %553 = vmatpush.msra.mxu0 0.0
        %554 = vmatpush.msra.mxu0 0.0
        %555 = vmatpush.msra.mxu0 0.0
        %556 = vmatpush.msra.mxu0 %v506
        %557 = vmatpush.msra.mxu0 %v504
        %558 = vmatpush.msra.mxu0 %v502
        %559 = vmatpush.msra.mxu0 %v500
        %560 = vmatpush.msra.mxu0 %v498
        %561 = vmatpush.msra.mxu0 %v496
        %562 = vmatpush.msra.mxu0 %v494
        %563 = vmatpush.msra.mxu0 %v492
        %564 = vmatpush.msra.mxu0 %v490
        %565 = vmatmul.f32.gmra.mxu0 %v521
        %v566 = vpop.f32.mrf.mxu0
        %v567 = vadd.f32 %v512, %v566
        %568 = vmatmul.f32.gmra.mxu0 %v524
        %v569 = vpop.f32.mrf.mxu0
        %v570 = vadd.f32 %v517, %v569
        %571 = vdwg.mxu0
        %v572 = vmax.f32 %v544, 0.0
        %v573 = vmax.f32 %v567, 0.0
        %v574 = vmax.f32 %v547, 0.0
        %v575 = vmax.f32 %v570, 0.0
        %576 = vst [vmem:[%s261] sm:$0xff] %v572
        %577 = vst [vmem:[%s261 + $0x8] sm:$0xff] %v573
        %578 = vst [vmem:[%s261 + $0x10] sm:$0xff] %v574
        %579 = vst [vmem:[%s261 + $0x18] sm:$0xff] %v575
        %s580 = sand.u32 %s160, 1
        %s581 = scalar_lea.sflag [#allocation6], %s580
        %s582 = sand.u32 %s160, 1
        %s583 = smul.addr %s582, 32
        %s584 = scalar_lea.vmem [#allocation7], %s583
        // Predicated region
        $region49: #{tpu_custom_call.1} parent=43 // pred_check
          %p585 = pneg %p170
        $region50: #{tpu_custom_call.1} parent=43 // pred_check_branch
          %587 = sbr.rel (%p585) target = $region52
        $region51: #{tpu_custom_call.1} parent=43 // pred_region
          %589 = vsyncadd %s581, 0
          %s590 = smul.addr %s21, 4
          %s591 = smul.addr %s590, 8
          %s592 = scalar_lea.hbm %s6, %s591
          %s593 = sshll.u32 %s584, 4
          %s594 = int_to_ptr.vmem [resolvable:$true] %s593
          %s595 = sshll.u32 %s592, 4
          %s596 = int_to_ptr.hbm [resolvable:$true] %s595
          %601 = dma.vmem_to_hbm [thread:$0]  %s594, 512, %s596, %s581, 256, 256, 16
        $region52: #{tpu_custom_call.1} parent=43 // pred_fallthru
          _
      $region44: #{tpu_custom_call.1} parent=5 // pred_fallthru
        _
      %p602 = scmp.le.s32.totalorder 2, %s16
      // Predicated region
      $region53: #{tpu_custom_call.1} parent=5 // pred_check
        %p603 = pneg %p602
      $region54: #{tpu_custom_call.1} parent=5 // pred_check_branch
        %605 = sbr.rel (%p603) target = $region56
      $region55: #{tpu_custom_call.1} parent=5 // pred_region
        %s606 = ssub.s32 %s16, 2
        // Predicated region
        $region57: #{tpu_custom_call.1} parent=55 // pred_check
          %p607 = pneg %p176
        $region58: #{tpu_custom_call.1} parent=55 // pred_check_branch
          %609 = sbr.rel (%p607) target = $region60
        $region59: #{tpu_custom_call.1} parent=55 // pred_region
          %s610 = sand.u32 %s161, 1
          %s611 = scalar_lea.sflag [#allocation6], %s610
          %s612 = sand.u32 %s161, 1
          %s613 = smul.addr %s612, 32
          %s614 = scalar_lea.vmem [#allocation7], %s613
          %616 = dma.done %s611, 512
        $region60: #{tpu_custom_call.1} parent=55 // pred_fallthru
          _
      $region56: #{tpu_custom_call.1} parent=5 // pred_fallthru
        _
    $region6: #{tpu_custom_call.1} parent=1 // loop_footer
      %s20 = sadd.s32 1, %s16
    $region7: #{tpu_custom_call.1} parent=1 // loop_footer_branch
      %15 = sbr.rel target = $region3
    $region8: #{tpu_custom_call.1} parent=1 // loop_exit
      _
    %617 = vsyncpa [#allocation5], 1
    %s618 = scalar_lea.sflag [#allocation5], 1
    %619 = vsyncpa %s618, 1
    %620 = vsyncpa [#allocation6], 1
    %s621 = scalar_lea.sflag [#allocation6], 1
    %622 = vsyncpa %s621, 1

</llo_original>
